<compile_context>
chip_gen: v6e
topology: v6e:2x2x1
jax: 0.10.0
libtpu: 0.0.40
codegen_flags: <defaults>
</compile_context>

<pallas_src>
import functools

import jax
import jax.numpy as jnp
from jax.experimental import pallas as pl
from jax.experimental.pallas import tpu as pltpu


# Fixed dijet -> jet mask pattern written by MultiHeadAttention.forward
# (rows = dijet g in 0..5, cols = jet j in 0..3; 1 = masked).
_FIXED_MASK = (
    (0, 0, 1, 1),
    (1, 1, 0, 0),
    (0, 1, 0, 1),
    (1, 0, 1, 0),
    (0, 1, 1, 0),
    (1, 0, 0, 1),
)

_G = 6   # qsl (number of dijets) -- hard-coded by the module's mask writes
_J = 4   # sl  (number of jets)
_C = 2   # qxkv channels


def fold_mha_params(raw):
    """Fold eval-mode GBN stats into the 1x1 convs and build the lane-layout
    structured matrices consumed by the kernel.  Call once, reuse across calls."""
    f32 = jnp.float32
    Wq = raw["qxk_w"].astype(f32)   # (D, 2)  Conv1d(2->D, k=1) weight (kernel dim squeezed)
    bq = raw["qxk_b"].astype(f32)   # (D,)
    mq = raw["qxk_m"].astype(f32)   # (2,)    qxk_conv GBN running mean
    sq = raw["qxk_s"].astype(f32)   # (2,)    qxk_conv GBN running std (must be > 0)
    g1 = raw["qk_gamma"].astype(f32)  # ()    qk_GBN (features = heads = 1)
    b1 = raw["qk_bias"].astype(f32)
    m1 = raw["qk_m"].astype(f32)
    s1 = raw["qk_s"].astype(f32)
    Wv = raw["vqk_w"].astype(f32)   # (D, D)  Conv1d(D->D, k=1) weight
    bv = raw["vqk_b"].astype(f32)   # (D,)
    mv = raw["vqk_m"].astype(f32)   # (D,)
    sv = raw["vqk_s"].astype(f32)   # (D,)

    D = int(Wq.shape[0])
    G, J, C = _G, _J, _C

    # GBN eval fold:  W @ ((x - m)/s) + b  ==  (W/s) @ x + (b - (W/s) @ m)
    Wq_f = Wq / sq[None, :]
    bq_f = bq - Wq_f @ mq
    Wv_f = Wv / sv[None, :]
    bv_f = bv - Wv_f @ mv
    a1 = g1 / s1
    c1 = b1 - g1 * m1 / s1

    eyeG = jnp.eye(G, dtype=f32)
    eyeJ = jnp.eye(J, dtype=f32)
    eyeD = jnp.eye(D, dtype=f32)
    oneG = jnp.ones((G,), f32)
    oneJ = jnp.ones((J,), f32)
    oneD = jnp.ones((D,), f32)

    # Lane layouts (all pure reshapes of the PyTorch NCL tensors):
    #   qxkv cols = c*24 + g*4 + j      k cols = o*4 + j     q/q0/out cols = o*6 + g
    #   "all-j" work cols = j*48 + o*6 + g                   score cols = j*6 + g
    A = jnp.einsum("oc,gh,jk->cgjkoh", Wq_f, eyeG, eyeJ).reshape(C * G * J, J * D * G)
    BQ = jnp.einsum("o,j,g->jog", bq_f, oneJ, oneG).reshape(1, J * D * G)
    EK = jnp.einsum("op,jk,g->ojkpg", eyeD, eyeJ, oneG).reshape(D * J, J * D * G)
    RA = (a1 * jnp.einsum("jk,o,gh->jogkh", eyeJ, oneD, eyeG)).reshape(J * D * G, J * G)
    CQ = jnp.full((1, J * G), c1, f32)
    WVB = jnp.einsum("po,gh->ogph", Wv_f, eyeG).reshape(D * G, D * G)
    BV = jnp.einsum("o,g->og", bv_f, oneG).reshape(1, D * G)
    PATJ = jnp.array(_FIXED_MASK, f32).T   # (J, G): PATJ[j, g]

    return dict(A=A, BQ=BQ, EK=EK, RA=RA, CQ=CQ, WVB=WVB, BV=BV, PATJ=PATJ, D=D)


def _mha_kernel(qxkv_ref, q_ref, k_ref, q0_ref, mj_ref,
                a_ref, bq_ref, ek_ref, ra_ref, cq_ref, wvb_ref, bv_ref, pat_ref,
                qout_ref, q0out_ref, *, iterations):
    f32 = jnp.float32
    G, J = _G, _J
    D = q_ref.shape[1] // G
    DG = D * G

    # batch rows on sublanes, flattened per-event features on lanes
    qxkv = qxkv_ref[...].astype(f32)          # (TB, 2*G*J)  cols c*24 + g*4 + j
    q = q_ref[...].astype(f32)                # (TB, D*G)    cols o*6 + g
    k = k_ref[...].astype(f32)                # (TB, D*J)    cols o*4 + j
    q0 = q0_ref[...].astype(f32)              # (TB, D*G)
    mj = mj_ref[...].astype(f32)              # (TB, J)      1.0 = jet masked

    neg_inf = jnp.float32(-1e9)               # module's negativeInfinity

    # qxk[o,g,j] (GBN + 1x1 conv folded into A/BQ) and k broadcast over g,
    # for all jets at once, j-major on lanes.  t = qxk * k is reused for the
    # scores and for the value contraction (the module sets v = k).
    qxk_all = jnp.dot(qxkv, a_ref[...], preferred_element_type=f32) + bq_ref[...]
    k_all = jnp.dot(k, ek_ref[...], preferred_element_type=f32)
    t_all = qxk_all * k_all                   # (TB, J*D*G)

    # per-event "all four jets masked" flag (module: vqk_mask)
    all_masked = jnp.sum(mj, axis=-1, keepdims=True) >= (J - 0.5)   # (TB, 1)

    # combined (dijet, jet) masks, one (TB, G) slab per jet j
    masks = []
    for j in range(J):
        pat_j = pat_ref[j:j + 1, :]                      # (1, G) fixed pattern row
        masks.append((pat_j + mj[:, j:j + 1]) > 0.5)     # (TB, G) bool

    def sig(x):
        return 1.0 / (1.0 + jnp.exp(-x))

    q_cur = q
    q0_new = q0
    for _ in range(iterations):
        # scores qk[g,j] = sum_o q[o,g]*qxk[o,g,j]*k[o,j], then the folded
        # qk_GBN affine (scale baked into RA, offset in CQ).
        qe = jnp.concatenate([q_cur] * J, axis=-1)                  # (TB, J*D*G)
        qk24 = jnp.dot(qe * t_all, ra_ref[...],
                       preferred_element_type=f32) + cq_ref[...]    # (TB, J*G) cols j*6+g

        s = [jnp.where(masks[j], neg_inf, qk24[:, j * G:(j + 1) * G]) for j in range(J)]
        # exact per-(event, dijet) softmax over the 4 jets (j fully unrolled)
        mrow = jnp.maximum(jnp.maximum(s[0], s[1]), jnp.maximum(s[2], s[3]))
        e = [jnp.exp(s[j] - mrow) for j in range(J)]
        inv_d = 1.0 / (e[0] + e[1] + e[2] + e[3])

        acc = jnp.zeros((q_cur.shape[0], DG), f32)
        for j in range(J):
            w_j = jnp.where(masks[j], 0.0, e[j] * inv_d) * sig(s[j])        # (TB, G)
            acc = acc + t_all[:, j * DG:(j + 1) * DG] * jnp.concatenate([w_j] * D, axis=-1)

        # vqk_conv (GBN folded into the 1x1 conv), zero fully-masked events
        vqk = jnp.dot(acc, wvb_ref[...], preferred_element_type=f32) + bv_ref[...]
        vqk = jnp.where(all_masked, 0.0, vqk)

        q0_new = q0 + vqk
        q_cur = q0_new * sig(q0_new)          # NonLU = SiLU

    qout_ref[...] = q_cur.astype(qout_ref.dtype)
    q0out_ref[...] = q0_new.astype(q0out_ref.dtype)


def multihead_attention_forward(q, k, v, q0, mask, qxkv, folded, *,
                                iterations=1, block_rows=1024):
    """q:(B,D,6) k:(B,D,4) v:ignored q0:(B,D,6) mask:(B,4) qxkv:(B,2,6,4) -> (q', q0')."""
    del v   # the PyTorch module overwrites v with k before using it
    assert iterations >= 1
    G, J, C = _G, _J, _C
    D = folded["D"]
    B = q.shape[0]
    assert q.shape == (B, D, G) and k.shape == (B, D, J) and q0.shape == (B, D, G)
    out_dtype = q.dtype

    # pure reshapes of the native NCL layouts (no transposes, no pad)
    q_f = q.reshape(B, D * G)
    k_f = k.reshape(B, D * J)
    q0_f = q0.reshape(B, D * G)
    qxkv_f = qxkv.reshape(B, C * G * J)
    mj = mask.reshape(B, J).astype(jnp.float32)

    # Row tile: big multiple of 8 (amortises ~0.35us/step), but keep >= 2 grid
    # steps when the batch allows so both v7x TensorCores get work; no padding --
    # the trailing partial block is handled by Pallas (rows never mix).
    if B <= 8:
        tb = B
    else:
        tb = max(8, (min(int(block_rows), B) // 8) * 8)
        if B >= 16:
            tb = min(tb, (((B + 1) // 2 + 7) // 8) * 8)
    n_tiles = pl.cdiv(B, tb)

    row = lambda i: (i, 0)
    const = lambda i: (0, 0)
    kernel = functools.partial(_mha_kernel, iterations=int(iterations))

    l_in, l_all, l_s, dg, dj = C * G * J, J * D * G, J * G, D * G, D * J
    mm = 2 * (l_in * l_all + dj * l_all) + iterations * 2 * (l_all * l_s + dg * dg)
    flops = B * (mm + 64 * dg)
    transcendentals = B * iterations * (2 * J * G + dg)
    bytes_accessed = 4 * B * (l_in + dj + J + 4 * dg) \
        + 4 * (l_in + dj + l_s + dg) * l_all

    q_out, q0_out = pl.pallas_call(
        kernel,
        out_shape=(jax.ShapeDtypeStruct((B, D * G), out_dtype),
                   jax.ShapeDtypeStruct((B, D * G), out_dtype)),
        grid=(n_tiles,),
        in_specs=[
            pl.BlockSpec((tb, C * G * J), row),          # qxkv
            pl.BlockSpec((tb, D * G), row),              # q
            pl.BlockSpec((tb, D * J), row),              # k
            pl.BlockSpec((tb, D * G), row),              # q0
            pl.BlockSpec((tb, J), row),                  # jet mask
            pl.BlockSpec((C * G * J, J * D * G), const),  # A    (resident)
            pl.BlockSpec((1, J * D * G), const),          # BQ
            pl.BlockSpec((D * J, J * D * G), const),      # EK
            pl.BlockSpec((J * D * G, J * G), const),      # RA
            pl.BlockSpec((1, J * G), const),              # CQ
            pl.BlockSpec((D * G, D * G), const),          # WVB
            pl.BlockSpec((1, D * G), const),              # BV
            pl.BlockSpec((J, G), const),                  # fixed mask pattern
        ],
        out_specs=(pl.BlockSpec((tb, D * G), row),
                   pl.BlockSpec((tb, D * G), row)),
        compiler_params=pltpu.CompilerParams(
            dimension_semantics=("parallel",),
            vmem_limit_bytes=48 * 1024 * 1024),
        cost_estimate=pl.CostEstimate(
            flops=flops, transcendentals=transcendentals,
            bytes_accessed=bytes_accessed),
    )(qxkv_f, q_f, k_f, q0_f, mj,
      folded["A"], folded["BQ"], folded["EK"], folded["RA"], folded["CQ"],
      folded["WVB"], folded["BV"], folded["PATJ"])

    return q_out.reshape(B, D, G), q0_out.reshape(B, D, G)


def _reference_forward(q, k, v, q0, mask, qxkv, raw, *, iterations=1):
    """Pure-JAX mirror of MultiHeadAttention.forward (eval mode, heads=1)."""
    del v
    f32 = jnp.float32
    hp = jax.lax.Precision.HIGHEST
    B, D, G = q.shape
    J = _J
    q = q.astype(f32); k = k.astype(f32); q0 = q0.astype(f32)
    x = qxkv.reshape(B, _C, G * J).astype(f32)

    # qxk_conv: GhostBatchNorm1d(2 -> D, conv=True), eval path
    xn = (x - raw["qxk_m"][None, :, None]) / raw["qxk_s"][None, :, None]
    qxk = jnp.einsum("oc,bcp->bop", raw["qxk_w"], xn, precision=hp) \
        + raw["qxk_b"][None, :, None]
    qxk = qxk.reshape(B, D, G, J)

    pat = jnp.array(_FIXED_MASK, dtype=bool)
    full_mask = jnp.logical_or(pat[None], mask.astype(bool)[:, None, :])   # (B,G,J)
    all_masked = jnp.sum(mask.astype(jnp.int32), axis=-1) == J             # (B,)

    q_cur, q0_new = q, q0
    for _ in range(iterations):
        qk = jnp.einsum("bdg,bdgj,bdj->bgj", q_cur, qxk, k, precision=hp)
        qk = (qk - raw["qk_m"]) / raw["qk_s"] * raw["qk_gamma"] + raw["qk_bias"]
        qk = jnp.where(full_mask, -1e9, qk)
        w = jax.nn.softmax(qk, axis=-1)
        w = jnp.where(full_mask, 0.0, w) * jax.nn.sigmoid(qk)
        out = jnp.einsum("bdgj,bdj,bgj->bdg", qxk, k, w, precision=hp)
        outn = (out - raw["vqk_m"][None, :, None]) / raw["vqk_s"][None, :, None]
        vqk = jnp.einsum("oc,bcg->bog", raw["vqk_w"], outn, precision=hp) \
            + raw["vqk_b"][None, :, None]
        vqk = jnp.where(all_masked[:, None, None], 0.0, vqk)
        q0_new = q0 + vqk
        q_cur = q0_new * jax.nn.sigmoid(q0_new)
    return q_cur, q0_new


if __name__ == "__main__":
    D, G, J = 8, _G, _J          # module defaults: dims 8, heads 1, qsl 6, sl 4
    key = jax.random.PRNGKey(0)
    keys = jax.random.split(key, 16)

    # Conv1d default init U(-sqrt(k), sqrt(k)), k = 1/(in_channels * kernel_size);
    # GBN running-std buffers must be > 0 (the module's eval path has no epsilon).
    kq = (1.0 / (2 * 1)) ** 0.5
    kv = (1.0 / (D * 1)) ** 0.5
    raw = dict(
        qxk_w=jax.random.uniform(keys[0], (D, 2), jnp.float32, -kq, kq),
        qxk_b=jax.random.uniform(keys[1], (D,), jnp.float32, -kq, kq),
        qxk_m=0.1 * jax.random.normal(keys[2], (2,), jnp.float32),
        qxk_s=1.0 + 0.1 * jax.random.uniform(keys[3], (2,), jnp.float32),
        qk_gamma=jnp.float32(1.1),
        qk_bias=jnp.float32(0.05),
        qk_m=jnp.float32(0.02),
        qk_s=jnp.float32(0.9),
        vqk_w=jax.random.uniform(keys[4], (D, D), jnp.float32, -kv, kv),
        vqk_b=jax.random.uniform(keys[5], (D,), jnp.float32, -kv, kv),
        vqk_m=0.1 * jax.random.normal(keys[6], (D,), jnp.float32),
        vqk_s=1.0 + 0.1 * jax.random.uniform(keys[7], (D,), jnp.float32),
    )
    folded = fold_mha_params(raw)   # built once, reused across forward calls

    def run_case(B, block_rows, kidx):
        kk = jax.random.split(keys[kidx], 8)
        q = jax.random.normal(kk[0], (B, D, G), jnp.float32)
        k = jax.random.normal(kk[1], (B, D, J), jnp.float32)
        v = jax.random.normal(kk[2], (B, D, J), jnp.float32)   # ignored by the module
        q0 = jax.random.normal(kk[3], (B, D, G), jnp.float32)
        qxkv = jax.random.normal(kk[4], (B, 2, G, J), jnp.float32)
        mask = jax.random.bernoulli(kk[5], 0.25, (B, J))
        mask = mask.at[0].set(False)     # one event with every jet present
        mask = mask.at[1].set(True)      # one fully-masked event (vqk_mask path)

        q_out, q0_out = multihead_attention_forward(
            q, k, v, q0, mask, qxkv, folded, block_rows=block_rows)
        q_out = jax.block_until_ready(q_out)
        q0_out = jax.block_until_ready(q0_out)

        q_ref, q0_ref = _reference_forward(q, k, v, q0, mask, qxkv, raw)
        assert q_out.shape == (B, D, G) and q0_out.shape == (B, D, G)
        assert jnp.allclose(q_out, q_ref, atol=1e-3, rtol=1e-3)
        assert jnp.allclose(q0_out, q0_ref, atol=1e-3, rtol=1e-3)

    run_case(2, 1024, 8)      # tiny batch: single (full-array) block
    run_case(300, 128, 9)     # ragged multi-tile row grid, no pad / no slice

    print("KERNEL_OK")
</pallas_src>

<mosaic_0001>
module attributes {stable_mosaic.version = 11 : i64} {
  func.func @_mha_kernel(%arg0: i32, %arg1: memref<2x48xf32, #tpu.memory_space<vmem>>, %arg2: memref<2x48xf32, #tpu.memory_space<vmem>>, %arg3: memref<2x32xf32, #tpu.memory_space<vmem>>, %arg4: memref<2x48xf32, #tpu.memory_space<vmem>>, %arg5: memref<2x4xf32, #tpu.memory_space<vmem>>, %arg6: memref<48x192xf32, #tpu.memory_space<vmem>>, %arg7: memref<1x192xf32, #tpu.memory_space<vmem>>, %arg8: memref<32x192xf32, #tpu.memory_space<vmem>>, %arg9: memref<192x24xf32, #tpu.memory_space<vmem>>, %arg10: memref<1x24xf32, #tpu.memory_space<vmem>>, %arg11: memref<48x48xf32, #tpu.memory_space<vmem>>, %arg12: memref<1x48xf32, #tpu.memory_space<vmem>>, %arg13: memref<4x6xf32, #tpu.memory_space<vmem>>, %arg14: memref<2x48xf32, #tpu.memory_space<vmem>>, %arg15: memref<2x48xf32, #tpu.memory_space<vmem>>) attributes {dimension_semantics = [#tpu.dimension_semantics<parallel>], iteration_bounds = array<i64: 1>, scalar_prefetch = 0 : i64, scratch_operands = 0 : i64, tpu.core_type = #tpu.core_type<tc>, window_params = [{transform_indices = @transform_0, window_bounds = array<i64: 2, 48>}, {transform_indices = @transform_1, window_bounds = array<i64: 2, 48>}, {transform_indices = @transform_2, window_bounds = array<i64: 2, 32>}, {transform_indices = @transform_3, window_bounds = array<i64: 2, 48>}, {transform_indices = @transform_4, window_bounds = array<i64: 2, 4>}, {pipeline_mode = #tpu.pipeline_mode<synchronous>, transform_indices = @transform_5, window_bounds = array<i64: 48, 192>}, {pipeline_mode = #tpu.pipeline_mode<synchronous>, transform_indices = @transform_6, window_bounds = array<i64: 1, 192>}, {pipeline_mode = #tpu.pipeline_mode<synchronous>, transform_indices = @transform_7, window_bounds = array<i64: 32, 192>}, {pipeline_mode = #tpu.pipeline_mode<synchronous>, transform_indices = @transform_8, window_bounds = array<i64: 192, 24>}, {pipeline_mode = #tpu.pipeline_mode<synchronous>, transform_indices = @transform_9, window_bounds = array<i64: 1, 24>}, {pipeline_mode = #tpu.pipeline_mode<synchronous>, transform_indices = @transform_10, window_bounds = array<i64: 48, 48>}, {pipeline_mode = #tpu.pipeline_mode<synchronous>, transform_indices = @transform_11, window_bounds = array<i64: 1, 48>}, {pipeline_mode = #tpu.pipeline_mode<synchronous>, transform_indices = @transform_12, window_bounds = array<i64: 4, 6>}, {transform_indices = @transform_13, window_bounds = array<i64: 2, 48>}, {transform_indices = @transform_14, window_bounds = array<i64: 2, 48>}]} {
    %c0 = arith.constant 0 : index
    %c0_0 = arith.constant 0 : index
    %0 = vector.load %arg1[%c0, %c0_0] : memref<2x48xf32, #tpu.memory_space<vmem>>, vector<2x48xf32>
    %c0_1 = arith.constant 0 : index
    %c0_2 = arith.constant 0 : index
    %1 = vector.load %arg2[%c0_1, %c0_2] : memref<2x48xf32, #tpu.memory_space<vmem>>, vector<2x48xf32>
    %c0_3 = arith.constant 0 : index
    %c0_4 = arith.constant 0 : index
    %2 = vector.load %arg3[%c0_3, %c0_4] : memref<2x32xf32, #tpu.memory_space<vmem>>, vector<2x32xf32>
    %c0_5 = arith.constant 0 : index
    %c0_6 = arith.constant 0 : index
    %3 = vector.load %arg4[%c0_5, %c0_6] : memref<2x48xf32, #tpu.memory_space<vmem>>, vector<2x48xf32>
    %c0_7 = arith.constant 0 : index
    %c0_8 = arith.constant 0 : index
    %4 = vector.load %arg5[%c0_7, %c0_8] : memref<2x4xf32, #tpu.memory_space<vmem>>, vector<2x4xf32>
    %c0_9 = arith.constant 0 : index
    %c0_10 = arith.constant 0 : index
    %5 = vector.load %arg6[%c0_9, %c0_10] : memref<48x192xf32, #tpu.memory_space<vmem>>, vector<48x192xf32>
    %cst = arith.constant dense<0.000000e+00> : vector<2x192xf32>
    %6 = tpu.matmul %0, %5, %cst {dimension_numbers = #tpu.dot_dimension_numbers<[1], [0], [0], [1], [0, 0, 1, 1], [], []>} : vector<2x48xf32>, vector<48x192xf32>, vector<2x192xf32> -> vector<2x192xf32>
    %c0_11 = arith.constant 0 : index
    %c0_12 = arith.constant 0 : index
    %7 = vector.load %arg7[%c0_11, %c0_12] : memref<1x192xf32, #tpu.memory_space<vmem>>, vector<1x192xf32>
    %8 = vector.broadcast %7 : vector<1x192xf32> to vector<2x192xf32>
    %9 = arith.addf %6, %8 : vector<2x192xf32>
    %c0_13 = arith.constant 0 : index
    %c0_14 = arith.constant 0 : index
    %10 = vector.load %arg8[%c0_13, %c0_14] : memref<32x192xf32, #tpu.memory_space<vmem>>, vector<32x192xf32>
    %cst_15 = arith.constant dense<0.000000e+00> : vector<2x192xf32>
    %11 = tpu.matmul %2, %10, %cst_15 {dimension_numbers = #tpu.dot_dimension_numbers<[1], [0], [0], [1], [0, 0, 1, 1], [], []>} : vector<2x32xf32>, vector<32x192xf32>, vector<2x192xf32> -> vector<2x192xf32>
    %12 = arith.mulf %9, %11 : vector<2x192xf32>
    %cst_16 = arith.constant dense<0.000000e+00> : vector<2xf32>
    %13 = vector.multi_reduction <add>, %4, %cst_16 [1] : vector<2x4xf32> to vector<2xf32>
    %14 = vector.shape_cast %13 : vector<2xf32> to vector<2x1xf32>
    %cst_17 = arith.constant 3.500000e+00 : f32
    %15 = vector.broadcast %cst_17 : f32 to vector<2x1xf32>
    %16 = arith.cmpf oge, %14, %15 : vector<2x1xf32>
    %c0_18 = arith.constant 0 : index
    %c0_19 = arith.constant 0 : index
    %17 = vector.load %arg13[%c0_18, %c0_19] : memref<4x6xf32, #tpu.memory_space<vmem>>, vector<1x6xf32>
    %18 = vector.extract_strided_slice %4 {offsets = [0, 0], sizes = [2, 1], strides = [1, 1]} : vector<2x4xf32> to vector<2x1xf32>
    %19 = vector.broadcast %17 : vector<1x6xf32> to vector<2x6xf32>
    %20 = vector.broadcast %18 : vector<2x1xf32> to vector<2x6xf32>
    %21 = arith.addf %19, %20 : vector<2x6xf32>
    %cst_20 = arith.constant 5.000000e-01 : f32
    %22 = vector.broadcast %cst_20 : f32 to vector<2x6xf32>
    %23 = arith.cmpf ogt, %21, %22 : vector<2x6xf32>
    %c1 = arith.constant 1 : index
    %c0_21 = arith.constant 0 : index
    %24 = vector.load %arg13[%c1, %c0_21] : memref<4x6xf32, #tpu.memory_space<vmem>>, vector<1x6xf32>
    %25 = vector.extract_strided_slice %4 {offsets = [0, 1], sizes = [2, 1], strides = [1, 1]} : vector<2x4xf32> to vector<2x1xf32>
    %26 = vector.broadcast %24 : vector<1x6xf32> to vector<2x6xf32>
    %27 = vector.broadcast %25 : vector<2x1xf32> to vector<2x6xf32>
    %28 = arith.addf %26, %27 : vector<2x6xf32>
    %cst_22 = arith.constant 5.000000e-01 : f32
    %29 = vector.broadcast %cst_22 : f32 to vector<2x6xf32>
    %30 = arith.cmpf ogt, %28, %29 : vector<2x6xf32>
    %c2 = arith.constant 2 : index
    %c0_23 = arith.constant 0 : index
    %31 = vector.load %arg13[%c2, %c0_23] : memref<4x6xf32, #tpu.memory_space<vmem>>, vector<1x6xf32>
    %32 = vector.extract_strided_slice %4 {offsets = [0, 2], sizes = [2, 1], strides = [1, 1]} : vector<2x4xf32> to vector<2x1xf32>
    %33 = vector.broadcast %31 : vector<1x6xf32> to vector<2x6xf32>
    %34 = vector.broadcast %32 : vector<2x1xf32> to vector<2x6xf32>
    %35 = arith.addf %33, %34 : vector<2x6xf32>
    %cst_24 = arith.constant 5.000000e-01 : f32
    %36 = vector.broadcast %cst_24 : f32 to vector<2x6xf32>
    %37 = arith.cmpf ogt, %35, %36 : vector<2x6xf32>
    %c3 = arith.constant 3 : index
    %c0_25 = arith.constant 0 : index
    %38 = vector.load %arg13[%c3, %c0_25] : memref<4x6xf32, #tpu.memory_space<vmem>>, vector<1x6xf32>
    %39 = vector.extract_strided_slice %4 {offsets = [0, 3], sizes = [2, 1], strides = [1, 1]} : vector<2x4xf32> to vector<2x1xf32>
    %40 = vector.broadcast %38 : vector<1x6xf32> to vector<2x6xf32>
    %41 = vector.broadcast %39 : vector<2x1xf32> to vector<2x6xf32>
    %42 = arith.addf %40, %41 : vector<2x6xf32>
    %cst_26 = arith.constant 5.000000e-01 : f32
    %43 = vector.broadcast %cst_26 : f32 to vector<2x6xf32>
    %44 = arith.cmpf ogt, %42, %43 : vector<2x6xf32>
    %45 = tpu.concatenate %1, %1, %1, %1 in 1 : vector<2x48xf32>, vector<2x48xf32>, vector<2x48xf32>, vector<2x48xf32> -> vector<2x192xf32>
    %46 = arith.mulf %45, %12 : vector<2x192xf32>
    %c0_27 = arith.constant 0 : index
    %c0_28 = arith.constant 0 : index
    %47 = vector.load %arg9[%c0_27, %c0_28] : memref<192x24xf32, #tpu.memory_space<vmem>>, vector<192x24xf32>
    %cst_29 = arith.constant dense<0.000000e+00> : vector<2x24xf32>
    %48 = tpu.matmul %46, %47, %cst_29 {dimension_numbers = #tpu.dot_dimension_numbers<[1], [0], [0], [1], [0, 0, 1, 1], [], []>} : vector<2x192xf32>, vector<192x24xf32>, vector<2x24xf32> -> vector<2x24xf32>
    %c0_30 = arith.constant 0 : index
    %c0_31 = arith.constant 0 : index
    %49 = vector.load %arg10[%c0_30, %c0_31] : memref<1x24xf32, #tpu.memory_space<vmem>>, vector<1x24xf32>
    %50 = vector.broadcast %49 : vector<1x24xf32> to vector<2x24xf32>
    %51 = arith.addf %48, %50 : vector<2x24xf32>
    %52 = vector.extract_strided_slice %51 {offsets = [0, 0], sizes = [2, 6], strides = [1, 1]} : vector<2x24xf32> to vector<2x6xf32>
    %cst_32 = arith.constant -1.000000e+09 : f32
    %53 = vector.broadcast %cst_32 : f32 to vector<2x6xf32>
    %54 = arith.select %23, %53, %52 : vector<2x6xi1>, vector<2x6xf32>
    %55 = vector.extract_strided_slice %51 {offsets = [0, 6], sizes = [2, 6], strides = [1, 1]} : vector<2x24xf32> to vector<2x6xf32>
    %cst_33 = arith.constant -1.000000e+09 : f32
    %56 = vector.broadcast %cst_33 : f32 to vector<2x6xf32>
    %57 = arith.select %30, %56, %55 : vector<2x6xi1>, vector<2x6xf32>
    %58 = vector.extract_strided_slice %51 {offsets = [0, 12], sizes = [2, 6], strides = [1, 1]} : vector<2x24xf32> to vector<2x6xf32>
    %cst_34 = arith.constant -1.000000e+09 : f32
    %59 = vector.broadcast %cst_34 : f32 to vector<2x6xf32>
    %60 = arith.select %37, %59, %58 : vector<2x6xi1>, vector<2x6xf32>
    %61 = vector.extract_strided_slice %51 {offsets = [0, 18], sizes = [2, 6], strides = [1, 1]} : vector<2x24xf32> to vector<2x6xf32>
    %cst_35 = arith.constant -1.000000e+09 : f32
    %62 = vector.broadcast %cst_35 : f32 to vector<2x6xf32>
    %63 = arith.select %44, %62, %61 : vector<2x6xi1>, vector<2x6xf32>
    %64 = arith.maximumf %54, %57 : vector<2x6xf32>
    %65 = arith.maximumf %60, %63 : vector<2x6xf32>
    %66 = arith.maximumf %64, %65 : vector<2x6xf32>
    %67 = arith.subf %54, %66 : vector<2x6xf32>
    %68 = math.exp %67 : vector<2x6xf32>
    %69 = arith.subf %57, %66 : vector<2x6xf32>
    %70 = math.exp %69 : vector<2x6xf32>
    %71 = arith.subf %60, %66 : vector<2x6xf32>
    %72 = math.exp %71 : vector<2x6xf32>
    %73 = arith.subf %63, %66 : vector<2x6xf32>
    %74 = math.exp %73 : vector<2x6xf32>
    %75 = arith.addf %68, %70 : vector<2x6xf32>
    %76 = arith.addf %75, %72 : vector<2x6xf32>
    %77 = arith.addf %76, %74 : vector<2x6xf32>
    %cst_36 = arith.constant 1.000000e+00 : f32
    %78 = vector.broadcast %cst_36 : f32 to vector<2x6xf32>
    %79 = arith.divf %78, %77 : vector<2x6xf32>
    %cst_37 = arith.constant 0.000000e+00 : f32
    %80 = vector.broadcast %cst_37 : f32 to vector<2x48xf32>
    %81 = arith.mulf %68, %79 : vector<2x6xf32>
    %cst_38 = arith.constant 0.000000e+00 : f32
    %82 = vector.broadcast %cst_38 : f32 to vector<2x6xf32>
    %83 = arith.select %23, %82, %81 : vector<2x6xi1>, vector<2x6xf32>
    %cst_39 = arith.constant 0.000000e+00 : f32
    %84 = vector.broadcast %cst_39 : f32 to vector<2x6xf32>
    %85 = arith.subf %84, %54 : vector<2x6xf32>
    %86 = math.exp %85 : vector<2x6xf32>
    %cst_40 = arith.constant 1.000000e+00 : f32
    %87 = vector.broadcast %cst_40 : f32 to vector<2x6xf32>
    %88 = arith.addf %87, %86 : vector<2x6xf32>
    %cst_41 = arith.constant 1.000000e+00 : f32
    %89 = vector.broadcast %cst_41 : f32 to vector<2x6xf32>
    %90 = arith.divf %89, %88 : vector<2x6xf32>
    %91 = arith.mulf %83, %90 : vector<2x6xf32>
    %92 = vector.extract_strided_slice %12 {offsets = [0, 0], sizes = [2, 48], strides = [1, 1]} : vector<2x192xf32> to vector<2x48xf32>
    %93 = tpu.concatenate %91, %91, %91, %91, %91, %91, %91, %91 in 1 : vector<2x6xf32>, vector<2x6xf32>, vector<2x6xf32>, vector<2x6xf32>, vector<2x6xf32>, vector<2x6xf32>, vector<2x6xf32>, vector<2x6xf32> -> vector<2x48xf32>
    %94 = arith.mulf %92, %93 : vector<2x48xf32>
    %95 = arith.addf %80, %94 : vector<2x48xf32>
    %96 = arith.mulf %70, %79 : vector<2x6xf32>
    %cst_42 = arith.constant 0.000000e+00 : f32
    %97 = vector.broadcast %cst_42 : f32 to vector<2x6xf32>
    %98 = arith.select %30, %97, %96 : vector<2x6xi1>, vector<2x6xf32>
    %cst_43 = arith.constant 0.000000e+00 : f32
    %99 = vector.broadcast %cst_43 : f32 to vector<2x6xf32>
    %100 = arith.subf %99, %57 : vector<2x6xf32>
    %101 = math.exp %100 : vector<2x6xf32>
    %cst_44 = arith.constant 1.000000e+00 : f32
    %102 = vector.broadcast %cst_44 : f32 to vector<2x6xf32>
    %103 = arith.addf %102, %101 : vector<2x6xf32>
    %cst_45 = arith.constant 1.000000e+00 : f32
    %104 = vector.broadcast %cst_45 : f32 to vector<2x6xf32>
    %105 = arith.divf %104, %103 : vector<2x6xf32>
    %106 = arith.mulf %98, %105 : vector<2x6xf32>
    %107 = vector.extract_strided_slice %12 {offsets = [0, 48], sizes = [2, 48], strides = [1, 1]} : vector<2x192xf32> to vector<2x48xf32>
    %108 = tpu.concatenate %106, %106, %106, %106, %106, %106, %106, %106 in 1 : vector<2x6xf32>, vector<2x6xf32>, vector<2x6xf32>, vector<2x6xf32>, vector<2x6xf32>, vector<2x6xf32>, vector<2x6xf32>, vector<2x6xf32> -> vector<2x48xf32>
    %109 = arith.mulf %107, %108 : vector<2x48xf32>
    %110 = arith.addf %95, %109 : vector<2x48xf32>
    %111 = arith.mulf %72, %79 : vector<2x6xf32>
    %cst_46 = arith.constant 0.000000e+00 : f32
    %112 = vector.broadcast %cst_46 : f32 to vector<2x6xf32>
    %113 = arith.select %37, %112, %111 : vector<2x6xi1>, vector<2x6xf32>
    %cst_47 = arith.constant 0.000000e+00 : f32
    %114 = vector.broadcast %cst_47 : f32 to vector<2x6xf32>
    %115 = arith.subf %114, %60 : vector<2x6xf32>
    %116 = math.exp %115 : vector<2x6xf32>
    %cst_48 = arith.constant 1.000000e+00 : f32
    %117 = vector.broadcast %cst_48 : f32 to vector<2x6xf32>
    %118 = arith.addf %117, %116 : vector<2x6xf32>
    %cst_49 = arith.constant 1.000000e+00 : f32
    %119 = vector.broadcast %cst_49 : f32 to vector<2x6xf32>
    %120 = arith.divf %119, %118 : vector<2x6xf32>
    %121 = arith.mulf %113, %120 : vector<2x6xf32>
    %122 = vector.extract_strided_slice %12 {offsets = [0, 96], sizes = [2, 48], strides = [1, 1]} : vector<2x192xf32> to vector<2x48xf32>
    %123 = tpu.concatenate %121, %121, %121, %121, %121, %121, %121, %121 in 1 : vector<2x6xf32>, vector<2x6xf32>, vector<2x6xf32>, vector<2x6xf32>, vector<2x6xf32>, vector<2x6xf32>, vector<2x6xf32>, vector<2x6xf32> -> vector<2x48xf32>
    %124 = arith.mulf %122, %123 : vector<2x48xf32>
    %125 = arith.addf %110, %124 : vector<2x48xf32>
    %126 = arith.mulf %74, %79 : vector<2x6xf32>
    %cst_50 = arith.constant 0.000000e+00 : f32
    %127 = vector.broadcast %cst_50 : f32 to vector<2x6xf32>
    %128 = arith.select %44, %127, %126 : vector<2x6xi1>, vector<2x6xf32>
    %cst_51 = arith.constant 0.000000e+00 : f32
    %129 = vector.broadcast %cst_51 : f32 to vector<2x6xf32>
    %130 = arith.subf %129, %63 : vector<2x6xf32>
    %131 = math.exp %130 : vector<2x6xf32>
    %cst_52 = arith.constant 1.000000e+00 : f32
    %132 = vector.broadcast %cst_52 : f32 to vector<2x6xf32>
    %133 = arith.addf %132, %131 : vector<2x6xf32>
    %cst_53 = arith.constant 1.000000e+00 : f32
    %134 = vector.broadcast %cst_53 : f32 to vector<2x6xf32>
    %135 = arith.divf %134, %133 : vector<2x6xf32>
    %136 = arith.mulf %128, %135 : vector<2x6xf32>
    %137 = vector.extract_strided_slice %12 {offsets = [0, 144], sizes = [2, 48], strides = [1, 1]} : vector<2x192xf32> to vector<2x48xf32>
    %138 = tpu.concatenate %136, %136, %136, %136, %136, %136, %136, %136 in 1 : vector<2x6xf32>, vector<2x6xf32>, vector<2x6xf32>, vector<2x6xf32>, vector<2x6xf32>, vector<2x6xf32>, vector<2x6xf32>, vector<2x6xf32> -> vector<2x48xf32>
    %139 = arith.mulf %137, %138 : vector<2x48xf32>
    %140 = arith.addf %125, %139 : vector<2x48xf32>
    %c0_54 = arith.constant 0 : index
    %c0_55 = arith.constant 0 : index
    %141 = vector.load %arg11[%c0_54, %c0_55] : memref<48x48xf32, #tpu.memory_space<vmem>>, vector<48x48xf32>
    %cst_56 = arith.constant dense<0.000000e+00> : vector<2x48xf32>
    %142 = tpu.matmul %140, %141, %cst_56 {dimension_numbers = #tpu.dot_dimension_numbers<[1], [0], [0], [1], [0, 0, 1, 1], [], []>} : vector<2x48xf32>, vector<48x48xf32>, vector<2x48xf32> -> vector<2x48xf32>
    %c0_57 = arith.constant 0 : index
    %c0_58 = arith.constant 0 : index
    %143 = vector.load %arg12[%c0_57, %c0_58] : memref<1x48xf32, #tpu.memory_space<vmem>>, vector<1x48xf32>
    %144 = vector.broadcast %143 : vector<1x48xf32> to vector<2x48xf32>
    %145 = arith.addf %142, %144 : vector<2x48xf32>
    %cst_59 = arith.constant 0.000000e+00 : f32
    %146 = vector.shape_cast %16 : vector<2x1xi1> to vector<2x1xi1>
    %147 = vector.broadcast %146 : vector<2x1xi1> to vector<2x48xi1>
    %148 = vector.broadcast %cst_59 : f32 to vector<2x48xf32>
    %149 = arith.select %147, %148, %145 : vector<2x48xi1>, vector<2x48xf32>
    %150 = arith.addf %3, %149 : vector<2x48xf32>
    %cst_60 = arith.constant 0.000000e+00 : f32
    %151 = vector.broadcast %cst_60 : f32 to vector<2x48xf32>
    %152 = arith.subf %151, %150 : vector<2x48xf32>
    %153 = math.exp %152 : vector<2x48xf32>
    %cst_61 = arith.constant 1.000000e+00 : f32
    %154 = vector.broadcast %cst_61 : f32 to vector<2x48xf32>
    %155 = arith.addf %154, %153 : vector<2x48xf32>
    %cst_62 = arith.constant 1.000000e+00 : f32
    %156 = vector.broadcast %cst_62 : f32 to vector<2x48xf32>
    %157 = arith.divf %156, %155 : vector<2x48xf32>
    %158 = arith.mulf %150, %157 : vector<2x48xf32>
    %c0_63 = arith.constant 0 : index
    %c0_64 = arith.constant 0 : index
    %159 = vector.load %arg14[%c0_63, %c0_64] : memref<2x48xf32, #tpu.memory_space<vmem>>, vector<2x48xf32>
    tpu.vector_store %arg14[%c0_63, %c0_64], %158 {strides = array<i32>} : memref<2x48xf32, #tpu.memory_space<vmem>>, vector<2x48xf32>,
    %c0_65 = arith.constant 0 : index
    %c0_66 = arith.constant 0 : index
    %160 = vector.load %arg15[%c0_65, %c0_66] : memref<2x48xf32, #tpu.memory_space<vmem>>, vector<2x48xf32>
    tpu.vector_store %arg15[%c0_65, %c0_66], %150 {strides = array<i32>} : memref<2x48xf32, #tpu.memory_space<vmem>>, vector<2x48xf32>,
    return
  }
  func.func @transform_0(%arg0: i32) -> (i32, i32) {
    %c0_i32 = arith.constant 0 : i32
    %c0_i32_0 = arith.constant 0 : i32
    return %arg0, %c0_i32 : i32, i32
  }
  func.func @transform_1(%arg0: i32) -> (i32, i32) {
    %c0_i32 = arith.constant 0 : i32
    %c0_i32_0 = arith.constant 0 : i32
    return %arg0, %c0_i32 : i32, i32
  }
  func.func @transform_2(%arg0: i32) -> (i32, i32) {
    %c0_i32 = arith.constant 0 : i32
    %c0_i32_0 = arith.constant 0 : i32
    return %arg0, %c0_i32 : i32, i32
  }
  func.func @transform_3(%arg0: i32) -> (i32, i32) {
    %c0_i32 = arith.constant 0 : i32
    %c0_i32_0 = arith.constant 0 : i32
    return %arg0, %c0_i32 : i32, i32
  }
  func.func @transform_4(%arg0: i32) -> (i32, i32) {
    %c0_i32 = arith.constant 0 : i32
    %c0_i32_0 = arith.constant 0 : i32
    return %arg0, %c0_i32 : i32, i32
  }
  func.func @transform_5(%arg0: i32) -> (i32, i32) {
    %c0_i32 = arith.constant 0 : i32
    %c0_i32_0 = arith.constant 0 : i32
    %c0_i32_1 = arith.constant 0 : i32
    return %c0_i32, %c0_i32_0 : i32, i32
  }
  func.func @transform_6(%arg0: i32) -> (i32, i32) {
    %c0_i32 = arith.constant 0 : i32
    %c0_i32_0 = arith.constant 0 : i32
    %c0_i32_1 = arith.constant 0 : i32
    return %c0_i32, %c0_i32_0 : i32, i32
  }
  func.func @transform_7(%arg0: i32) -> (i32, i32) {
    %c0_i32 = arith.constant 0 : i32
    %c0_i32_0 = arith.constant 0 : i32
    %c0_i32_1 = arith.constant 0 : i32
    return %c0_i32, %c0_i32_0 : i32, i32
  }
  func.func @transform_8(%arg0: i32) -> (i32, i32) {
    %c0_i32 = arith.constant 0 : i32
    %c0_i32_0 = arith.constant 0 : i32
    %c0_i32_1 = arith.constant 0 : i32
    return %c0_i32, %c0_i32_0 : i32, i32
  }
  func.func @transform_9(%arg0: i32) -> (i32, i32) {
    %c0_i32 = arith.constant 0 : i32
    %c0_i32_0 = arith.constant 0 : i32
    %c0_i32_1 = arith.constant 0 : i32
    return %c0_i32, %c0_i32_0 : i32, i32
  }
  func.func @transform_10(%arg0: i32) -> (i32, i32) {
    %c0_i32 = arith.constant 0 : i32
    %c0_i32_0 = arith.constant 0 : i32
    %c0_i32_1 = arith.constant 0 : i32
    return %c0_i32, %c0_i32_0 : i32, i32
  }
  func.func @transform_11(%arg0: i32) -> (i32, i32) {
    %c0_i32 = arith.constant 0 : i32
    %c0_i32_0 = arith.constant 0 : i32
    %c0_i32_1 = arith.constant 0 : i32
    return %c0_i32, %c0_i32_0 : i32, i32
  }
  func.func @transform_12(%arg0: i32) -> (i32, i32) {
    %c0_i32 = arith.constant 0 : i32
    %c0_i32_0 = arith.constant 0 : i32
    %c0_i32_1 = arith.constant 0 : i32
    return %c0_i32, %c0_i32_0 : i32, i32
  }
  func.func @transform_13(%arg0: i32) -> (i32, i32) {
    %c0_i32 = arith.constant 0 : i32
    %c0_i32_0 = arith.constant 0 : i32
    return %arg0, %c0_i32 : i32, i32
  }
  func.func @transform_14(%arg0: i32) -> (i32, i32) {
    %c0_i32 = arith.constant 0 : i32
    %c0_i32_0 = arith.constant 0 : i32
    return %arg0, %c0_i32 : i32, i32
  }
}

</mosaic_0001>

<llo_original>
// kernel: tpu_custom_call.1
$region0: #{tpu_custom_call.1}
  #allocation0 [shape = 'u32[]', space=smem, size = 0x4, offset = 0x4, fixed_abs, tag = 'smem constant byte address 0x4 - core index']
  #allocation1 [shape = 'u32[144,128]{1,0:T(1,128)}', space=vmem, size = 0x12000, scoped, tag = 'internal scratch']
  %s0 = inlined_call_operand.vmem [shape: f32[2,48], index: 0, kind: input, shape index: {}]
  %s1 = inlined_call_operand.vmem [shape: f32[2,48], index: 1, kind: input, shape index: {}]
  %s2 = inlined_call_operand.vmem [shape: f32[2,32], index: 2, kind: input, shape index: {}]
  %s3 = inlined_call_operand.vmem [shape: f32[2,48], index: 3, kind: input, shape index: {}]
  %s4 = inlined_call_operand.vmem [shape: f32[2,4], index: 4, kind: input, shape index: {}]
  %s5 = inlined_call_operand.vmem [shape: f32[48,192], index: 5, kind: input, shape index: {}]
  %s6 = inlined_call_operand.vmem [shape: f32[1,192], index: 6, kind: input, shape index: {}]
  %s7 = inlined_call_operand.vmem [shape: f32[32,192], index: 7, kind: input, shape index: {}]
  %s8 = inlined_call_operand.vmem [shape: f32[192,24], index: 8, kind: input, shape index: {}]
  %s9 = inlined_call_operand.vmem [shape: f32[1,24], index: 9, kind: input, shape index: {}]
  %s10 = inlined_call_operand.vmem [shape: f32[48,48], index: 10, kind: input, shape index: {}]
  %s11 = inlined_call_operand.vmem [shape: f32[1,48], index: 11, kind: input, shape index: {}]
  %s12 = inlined_call_operand.vmem [shape: f32[4,6], index: 12, kind: input, shape index: {}]
  %s13 = inlined_call_operand.hbm [shape: f32[2,48], index: 13, kind: output, shape index: {0}]
  %s14 = inlined_call_operand.hbm [shape: f32[2,48], index: 14, kind: output, shape index: {1}]
  %15 = xla_tuple %s13, %s14
  %s16 = sld [smem:[#allocation0]]
  $region70: #{tpu_custom_call.1} parent=0
    _
  %s18 = ssub.s32 1, %s16
  %s19 = scalar_select 0, %s18, %s16
  $region1: #{tpu_custom_call.1} parent=0
    #allocation2 [shape = 'u8[1024]{0}', space=vmem, size = 0x400, scoped, tag = 'output window, operand 0, single buffered']
    #allocation3 [shape = 's32[1]{0}', space=sflag, size = 0x4, scoped, tag = 'scoped memory for tpu_custom_call.1']
    #allocation4 [shape = 'u8[1024]{0}', space=vmem, size = 0x400, scoped, tag = 'output window, operand 1, single buffered']
    #allocation5 [shape = 's32[1]{0}', space=sflag, size = 0x4, scoped, tag = 'scoped memory for tpu_custom_call.1']
    %20 = vsyncpa [#allocation3], 0
    %21 = vsyncpa [#allocation5], 0
    // Predicated region
    $region2: #{tpu_custom_call.1} parent=1 // pred_check
      _
    $region3: #{tpu_custom_call.1} parent=1 // pred_check_branch
      %23 = sbr.rel (0) target = $region5
    $region4: #{tpu_custom_call.1} parent=1 // pred_region
      _
    $region5: #{tpu_custom_call.1} parent=1 // pred_fallthru
      _
    // Predicated region
    $region6: #{tpu_custom_call.1} parent=1 // pred_check
      _
    $region7: #{tpu_custom_call.1} parent=1 // pred_check_branch
      %25 = sbr.rel (0) target = $region9
    $region8: #{tpu_custom_call.1} parent=1 // pred_region
      _
    $region9: #{tpu_custom_call.1} parent=1 // pred_fallthru
      _
    // Predicated region
    $region10: #{tpu_custom_call.1} parent=1 // pred_check
      _
    $region11: #{tpu_custom_call.1} parent=1 // pred_check_branch
      %27 = sbr.rel (0) target = $region13
    $region12: #{tpu_custom_call.1} parent=1 // pred_region
      _
    $region13: #{tpu_custom_call.1} parent=1 // pred_fallthru
      _
    // Predicated region
    $region14: #{tpu_custom_call.1} parent=1 // pred_check
      _
    $region15: #{tpu_custom_call.1} parent=1 // pred_check_branch
      %29 = sbr.rel (0) target = $region17
    $region16: #{tpu_custom_call.1} parent=1 // pred_region
      _
    $region17: #{tpu_custom_call.1} parent=1 // pred_fallthru
      _
    // Predicated region
    $region18: #{tpu_custom_call.1} parent=1 // pred_check
      _
    $region19: #{tpu_custom_call.1} parent=1 // pred_check_branch
      %31 = sbr.rel (0) target = $region21
    $region20: #{tpu_custom_call.1} parent=1 // pred_region
      _
    $region21: #{tpu_custom_call.1} parent=1 // pred_fallthru
      _
    // Predicated region
    $region22: #{tpu_custom_call.1} parent=1 // pred_check
      _
    $region23: #{tpu_custom_call.1} parent=1 // pred_check_branch
      %33 = sbr.rel (0) target = $region25
    $region24: #{tpu_custom_call.1} parent=1 // pred_region
      _
    $region25: #{tpu_custom_call.1} parent=1 // pred_fallthru
      _
    // Predicated region
    $region26: #{tpu_custom_call.1} parent=1 // pred_check
      _
    $region27: #{tpu_custom_call.1} parent=1 // pred_check_branch
      %35 = sbr.rel (0) target = $region29
    $region28: #{tpu_custom_call.1} parent=1 // pred_region
      _
    $region29: #{tpu_custom_call.1} parent=1 // pred_fallthru
      _
    // Predicated region
    $region30: #{tpu_custom_call.1} parent=1 // pred_check
      _
    $region31: #{tpu_custom_call.1} parent=1 // pred_check_branch
      %37 = sbr.rel (0) target = $region33
    $region32: #{tpu_custom_call.1} parent=1 // pred_region
      _
    $region33: #{tpu_custom_call.1} parent=1 // pred_fallthru
      _
    // Predicated region
    $region34: #{tpu_custom_call.1} parent=1 // pred_check
      _
    $region35: #{tpu_custom_call.1} parent=1 // pred_check_branch
      %39 = sbr.rel (0) target = $region37
    $region36: #{tpu_custom_call.1} parent=1 // pred_region
      _
    $region37: #{tpu_custom_call.1} parent=1 // pred_fallthru
      _
    // Predicated region
    $region38: #{tpu_custom_call.1} parent=1 // pred_check
      _
    $region39: #{tpu_custom_call.1} parent=1 // pred_check_branch
      %41 = sbr.rel (0) target = $region41
    $region40: #{tpu_custom_call.1} parent=1 // pred_region
      _
    $region41: #{tpu_custom_call.1} parent=1 // pred_fallthru
      _
    // Predicated region
    $region42: #{tpu_custom_call.1} parent=1 // pred_check
      _
    $region43: #{tpu_custom_call.1} parent=1 // pred_check_branch
      %43 = sbr.rel (0) target = $region45
    $region44: #{tpu_custom_call.1} parent=1 // pred_region
      _
    $region45: #{tpu_custom_call.1} parent=1 // pred_fallthru
      _
    // Predicated region
    $region46: #{tpu_custom_call.1} parent=1 // pred_check
      _
    $region47: #{tpu_custom_call.1} parent=1 // pred_check_branch
      %45 = sbr.rel (0) target = $region49
    $region48: #{tpu_custom_call.1} parent=1 // pred_region
      _
    $region49: #{tpu_custom_call.1} parent=1 // pred_fallthru
      _
    // Predicated region
    $region50: #{tpu_custom_call.1} parent=1 // pred_check
      _
    $region51: #{tpu_custom_call.1} parent=1 // pred_check_branch
      %47 = sbr.rel (0) target = $region53
    $region52: #{tpu_custom_call.1} parent=1 // pred_region
      _
    $region53: #{tpu_custom_call.1} parent=1 // pred_fallthru
      _
    %v48 = vld [vmem:[%s0] sm:$0x3]
    %v49 = vld [vmem:[%s1] sm:$0x3]
    %v50 = vld [vmem:[%s2] sm:$0x3]
    %v51 = vld [vmem:[%s3] sm:$0x3]
    %v52 = vld [vmem:[%s4] sm:$0x3]
    %v53 = vld [vmem:[%s5] sm:$0xff]
    %v54 = vld [vmem:[%s5 + $0x8] sm:$0xff]
    %v55 = vld [vmem:[%s5 + $0x10] sm:$0xff]
    %v56 = vld [vmem:[%s5 + $0x18] sm:$0xff]
    %v57 = vld [vmem:[%s5 + $0x20] sm:$0xff]
    %v58 = vld [vmem:[%s5 + $0x28] sm:$0xff]
    %v59 = vld [vmem:[%s5 + $0x30] sm:$0xff]
    %v60 = vld [vmem:[%s5 + $0x38] sm:$0xff]
    %v61 = vld [vmem:[%s5 + $0x40] sm:$0xff]
    %v62 = vld [vmem:[%s5 + $0x48] sm:$0xff]
    %v63 = vld [vmem:[%s5 + $0x50] sm:$0xff]
    %v64 = vld [vmem:[%s5 + $0x58] sm:$0xff]
    %v65 = vld [vmem:[%s6] sm:$0x3]
    %v67 = vlaneseq
    %v68 = vshrl.u32 %v67, 7
    %v69 = vsub.s32 0, %v68
    %v70 = vrot.slane %v65, %v69
    %v71 = vlaneseq
    %v72 = vshrl.u32 %v71, 7
    %v73 = vsub.s32 1, %v72
    %v74 = vrot.slane %v65, %v73
    %vm77 = vcmask 392192
    %v79 = vsel %vm77, %v48, 0
    %81 = vmatprep.subr.mxu0 0.0
    %82 = vmatpush1.msra.mxu0 0.0
    %83 = vmatprep.subr.mxu0 0.0
    %84 = vmatpush1.msra.mxu0 0.0
    %85 = vmatprep.subr.mxu0 0.0
    %86 = vmatpush1.msra.mxu0 0.0
    %87 = vmatprep.subr.mxu0 0.0
    %88 = vmatpush1.msra.mxu0 0.0
    %89 = vmatprep.subr.mxu0 0.0
    %90 = vmatpush1.msra.mxu0 0.0
    %91 = vmatprep.subr.mxu0 0.0
    %92 = vmatpush1.msra.mxu0 0.0
    %93 = vmatprep.subr.mxu0 0.0
    %94 = vmatpush1.msra.mxu0 0.0
    %95 = vmatprep.subr.mxu0 0.0
    %96 = vmatpush1.msra.mxu0 0.0
    %97 = vmatprep.subr.mxu0 0.0
    %98 = vmatpush1.msra.mxu0 0.0
    %99 = vmatprep.subr.mxu0 0.0
    %100 = vmatpush1.msra.mxu0 0.0
    %101 = vmatprep.subr.mxu0 %v64
    %102 = vmatpush1.msra.mxu0 %v63
    %103 = vmatprep.subr.mxu0 %v62
    %104 = vmatpush1.msra.mxu0 %v61
    %105 = vmatprep.subr.mxu0 %v60
    %106 = vmatpush1.msra.mxu0 %v59
    %107 = vmatprep.subr.mxu0 %v58
    %108 = vmatpush1.msra.mxu0 %v57
    %109 = vmatprep.subr.mxu0 %v56
    %110 = vmatpush1.msra.mxu0 %v55
    %111 = vmatprep.subr.mxu0 %v54
    %112 = vmatpush1.msra.mxu0 %v53
    %113 = vmatprep.subr.mxu0 0.0
    %114 = vmatpush2.msra.mxu0 0.0
    %115 = vmatprep.subr.mxu0 0.0
    %116 = vmatpush2.msra.mxu0 0.0
    %117 = vmatprep.subr.mxu0 0.0
    %118 = vmatpush2.msra.mxu0 0.0
    %119 = vmatprep.subr.mxu0 0.0
    %120 = vmatpush2.msra.mxu0 0.0
    %121 = vmatprep.subr.mxu0 0.0
    %122 = vmatpush2.msra.mxu0 0.0
    %123 = vmatprep.subr.mxu0 0.0
    %124 = vmatpush2.msra.mxu0 0.0
    %125 = vmatprep.subr.mxu0 0.0
    %126 = vmatpush2.msra.mxu0 0.0
    %127 = vmatprep.subr.mxu0 0.0
    %128 = vmatpush2.msra.mxu0 0.0
    %129 = vmatprep.subr.mxu0 0.0
    %130 = vmatpush2.msra.mxu0 0.0
    %131 = vmatprep.subr.mxu0 0.0
    %132 = vmatpush2.msra.mxu0 0.0
    %133 = vmatprep.subr.mxu0 0.0
    %134 = vmatpush2.msra.mxu0 0.0
    %135 = vmatprep.subr.mxu0 0.0
    %136 = vmatpush2.msra.mxu0 0.0
    %137 = vmatprep.subr.mxu0 0.0
    %138 = vmatpush2.msra.mxu0 0.0
    %139 = vmatprep.subr.mxu0 0.0
    %140 = vmatpush2.msra.mxu0 0.0
    %141 = vmatprep.subr.mxu0 0.0
    %142 = vmatpush2.msra.mxu0 0.0
    %143 = vmatprep.subr.mxu0 0.0
    %144 = vmatpush2.msra.mxu0 0.0
    %145 = vmatprep.mubr.f32.mxu0 0.0
    %146 = vmatmul.mubr.f32.gmra.mxu0 %v79
    %v147 = vpop.f32.mrf.mxu0
    %v148 = vadd.f32 %v70, %v147
    %v149 = vpop.f32.mrf.mxu0
    %v150 = vadd.f32 %v74, %v149
    %151 = vdwg.mxu0
    %v152 = vld [vmem:[%s7] sm:$0xff]
    %v153 = vld [vmem:[%s7 + $0x8] sm:$0xff]
    %v154 = vld [vmem:[%s7 + $0x10] sm:$0xff]
    %v155 = vld [vmem:[%s7 + $0x18] sm:$0xff]
    %v156 = vld [vmem:[%s7 + $0x20] sm:$0xff]
    %v157 = vld [vmem:[%s7 + $0x28] sm:$0xff]
    %v158 = vld [vmem:[%s7 + $0x30] sm:$0xff]
    %v159 = vld [vmem:[%s7 + $0x38] sm:$0xff]
    %vm160 = vcmask 261120
    %v162 = vsel %vm160, %v50, 0
    %164 = vmatprep.subr.mxu0 0.0
    %165 = vmatpush1.msra.mxu0 0.0
    %166 = vmatprep.subr.mxu0 0.0
    %167 = vmatpush1.msra.mxu0 0.0
    %168 = vmatprep.subr.mxu0 0.0
    %169 = vmatpush1.msra.mxu0 0.0
    %170 = vmatprep.subr.mxu0 0.0
    %171 = vmatpush1.msra.mxu0 0.0
    %172 = vmatprep.subr.mxu0 0.0
    %173 = vmatpush1.msra.mxu0 0.0
    %174 = vmatprep.subr.mxu0 0.0
    %175 = vmatpush1.msra.mxu0 0.0
    %176 = vmatprep.subr.mxu0 0.0
    %177 = vmatpush1.msra.mxu0 0.0
    %178 = vmatprep.subr.mxu0 0.0
    %179 = vmatpush1.msra.mxu0 0.0
    %180 = vmatprep.subr.mxu0 0.0
    %181 = vmatpush1.msra.mxu0 0.0
    %182 = vmatprep.subr.mxu0 0.0
    %183 = vmatpush1.msra.mxu0 0.0
    %184 = vmatprep.subr.mxu0 0.0
    %185 = vmatpush1.msra.mxu0 0.0
    %186 = vmatprep.subr.mxu0 0.0
    %187 = vmatpush1.msra.mxu0 0.0
    %188 = vmatprep.subr.mxu0 %v159
    %189 = vmatpush1.msra.mxu0 %v158
    %190 = vmatprep.subr.mxu0 %v157
    %191 = vmatpush1.msra.mxu0 %v156
    %192 = vmatprep.subr.mxu0 %v155
    %193 = vmatpush1.msra.mxu0 %v154
    %194 = vmatprep.subr.mxu0 %v153
    %195 = vmatpush1.msra.mxu0 %v152
    %196 = vmatprep.subr.mxu0 0.0
    %197 = vmatpush2.msra.mxu0 0.0
    %198 = vmatprep.subr.mxu0 0.0
    %199 = vmatpush2.msra.mxu0 0.0
    %200 = vmatprep.subr.mxu0 0.0
    %201 = vmatpush2.msra.mxu0 0.0
    %202 = vmatprep.subr.mxu0 0.0
    %203 = vmatpush2.msra.mxu0 0.0
    %204 = vmatprep.subr.mxu0 0.0
    %205 = vmatpush2.msra.mxu0 0.0
    %206 = vmatprep.subr.mxu0 0.0
    %207 = vmatpush2.msra.mxu0 0.0
    %208 = vmatprep.subr.mxu0 0.0
    %209 = vmatpush2.msra.mxu0 0.0
    %210 = vmatprep.subr.mxu0 0.0
    %211 = vmatpush2.msra.mxu0 0.0
    %212 = vmatprep.subr.mxu0 0.0
    %213 = vmatpush2.msra.mxu0 0.0
    %214 = vmatprep.subr.mxu0 0.0
    %215 = vmatpush2.msra.mxu0 0.0
    %216 = vmatprep.subr.mxu0 0.0
    %217 = vmatpush2.msra.mxu0 0.0
    %218 = vmatprep.subr.mxu0 0.0
    %219 = vmatpush2.msra.mxu0 0.0
    %220 = vmatprep.subr.mxu0 0.0
    %221 = vmatpush2.msra.mxu0 0.0
    %222 = vmatprep.subr.mxu0 0.0
    %223 = vmatpush2.msra.mxu0 0.0
    %224 = vmatprep.subr.mxu0 0.0
    %225 = vmatpush2.msra.mxu0 0.0
    %226 = vmatprep.subr.mxu0 0.0
    %227 = vmatpush2.msra.mxu0 0.0
    %228 = vmatprep.mubr.f32.mxu0 0.0
    %229 = vmatmul.mubr.f32.gmra.mxu0 %v162
    %v230 = vpop.f32.mrf.mxu0
    %v231 = vadd.f32 0.0, %v230
    %v232 = vpop.f32.mrf.mxu0
    %v233 = vadd.f32 0.0, %v232
    %234 = vdwg.mxu0
    %v235 = vmul.f32 %v148, %v231
    %v236 = vmul.f32 %v150, %v233
    %vm237 = vcmask 25600
    %v238 = vsel %vm237, %v52, 0.0
    %239 = vadd.xlane.f32.xlu0 %v238
    %v240 = vpop.xlane.xlu0 %239
    %vm241 = vcmp.ge.f32.partialorder %v240, 3.5
    %v242 = vld [vmem:[%s12] sm:$0x1]
    %v243 = vlaneseq
    %v244 = vshrl.u32 %v243, 7
    %v245 = vsub.s32 0, %v244
    %v246 = vrot.slane %v242, %v245
    %248 = vset.pattern.permute.xlu0 0
    %249 = vperm.xlu0 %248, %v52
    %v250 = vpop.permute.xlu0 %249
    %v252 = vadd.f32 %v246, %v250
    %vm253 = vcmp.gt.f32.partialorder %v252, 0.5
    %v254 = vld [vmem:[%s12 + $0x1] sm:$0x1]
    %v255 = vlaneseq
    %v256 = vshrl.u32 %v255, 7
    %v257 = vsub.s32 0, %v256
    %v258 = vrot.slane %v254, %v257
    %259 = vset.pattern.permute.xlu0 1
    %260 = vperm.xlu0 %259, %v52
    %v261 = vpop.permute.xlu0 %260
    %v263 = vadd.f32 %v258, %v261
    %vm264 = vcmp.gt.f32.partialorder %v263, 0.5
    %v265 = vld [vmem:[%s12 + $0x2] sm:$0x1]
    %v266 = vlaneseq
    %v267 = vshrl.u32 %v266, 7
    %v268 = vsub.s32 0, %v267
    %v269 = vrot.slane %v265, %v268
    %270 = vset.pattern.permute.xlu0 2
    %271 = vperm.xlu0 %270, %v52
    %v272 = vpop.permute.xlu0 %271
    %v274 = vadd.f32 %v269, %v272
    %vm275 = vcmp.gt.f32.partialorder %v274, 0.5
    %v276 = vld [vmem:[%s12 + $0x3] sm:$0x1]
    %v277 = vlaneseq
    %v278 = vshrl.u32 %v277, 7
    %v279 = vsub.s32 0, %v278
    %v280 = vrot.slane %v276, %v279
    %281 = vset.pattern.permute.xlu0 3
    %282 = vperm.xlu0 %281, %v52
    %v283 = vpop.permute.xlu0 %282
    %v285 = vadd.f32 %v280, %v283
    %vm286 = vcmp.gt.f32.partialorder %v285, 0.5
    %288 = vrot.lane.b32.xlu0 %v49, 48
    %v289 = vpop.permute.xlu0 %288
    %291 = vrot.lane.b32.xlu0 %v49, 96
    %v292 = vpop.permute.xlu0 %291
    %294 = vrot.lane.b32.xlu0 %v49, 16
    %v295 = vpop.permute.xlu0 %294
    %v297 = vsel %vm77, %v49, %v289
    %vm298 = vcmask 785408
    %v299 = vsel %vm298, %v297, %v292
    %vm300 = vcmask 130048
    %v301 = vsel %vm300, %v292, %v295
    %v302 = vmul.f32 %v299, %v235
    %v303 = vmul.f32 %v301, %v236
    %v304 = vld [vmem:[%s8] sm:$0xff]
    %v305 = vld [vmem:[%s8 + $0x8] sm:$0xff]
    %v306 = vld [vmem:[%s8 + $0x10] sm:$0xff]
    %v307 = vld [vmem:[%s8 + $0x18] sm:$0xff]
    %v308 = vld [vmem:[%s8 + $0x20] sm:$0xff]
    %v309 = vld [vmem:[%s8 + $0x28] sm:$0xff]
    %v310 = vld [vmem:[%s8 + $0x30] sm:$0xff]
    %v311 = vld [vmem:[%s8 + $0x38] sm:$0xff]
    %v312 = vld [vmem:[%s8 + $0x40] sm:$0xff]
    %v313 = vld [vmem:[%s8 + $0x48] sm:$0xff]
    %v314 = vld [vmem:[%s8 + $0x50] sm:$0xff]
    %v315 = vld [vmem:[%s8 + $0x58] sm:$0xff]
    %v316 = vld [vmem:[%s8 + $0x60] sm:$0xff]
    %v317 = vld [vmem:[%s8 + $0x68] sm:$0xff]
    %v318 = vld [vmem:[%s8 + $0x70] sm:$0xff]
    %v319 = vld [vmem:[%s8 + $0x78] sm:$0xff]
    %v320 = vld [vmem:[%s8 + $0x80] sm:$0xff]
    %v321 = vld [vmem:[%s8 + $0x88] sm:$0xff]
    %v322 = vld [vmem:[%s8 + $0x90] sm:$0xff]
    %v323 = vld [vmem:[%s8 + $0x98] sm:$0xff]
    %v324 = vld [vmem:[%s8 + $0xa0] sm:$0xff]
    %v325 = vld [vmem:[%s8 + $0xa8] sm:$0xff]
    %v326 = vld [vmem:[%s8 + $0xb0] sm:$0xff]
    %v327 = vld [vmem:[%s8 + $0xb8] sm:$0xff]
    %v328 = vld [vmem:[%s9] sm:$0x1]
    %v330 = vlaneseq
    %v331 = vshrl.u32 %v330, 7
    %v332 = vsub.s32 0, %v331
    %v333 = vrot.slane %v328, %v332
    %vm335 = vcmask 523264
    %v337 = vsel %vm335, %v303, 0
    %339 = vmatprep.subr.mxu0 0.0
    %340 = vmatpush1.msra.mxu0 %v319
    %341 = vmatprep.subr.mxu0 0.0
    %342 = vmatpush1.msra.mxu0 %v318
    %343 = vmatprep.subr.mxu0 0.0
    %344 = vmatpush1.msra.mxu0 %v317
    %345 = vmatprep.subr.mxu0 0.0
    %346 = vmatpush1.msra.mxu0 %v316
    %347 = vmatprep.subr.mxu0 0.0
    %348 = vmatpush1.msra.mxu0 %v315
    %349 = vmatprep.subr.mxu0 0.0
    %350 = vmatpush1.msra.mxu0 %v314
    %351 = vmatprep.subr.mxu0 0.0
    %352 = vmatpush1.msra.mxu0 %v313
    %353 = vmatprep.subr.mxu0 0.0
    %354 = vmatpush1.msra.mxu0 %v312
    %355 = vmatprep.subr.mxu0 0.0
    %356 = vmatpush1.msra.mxu0 %v311
    %357 = vmatprep.subr.mxu0 0.0
    %358 = vmatpush1.msra.mxu0 %v310
    %359 = vmatprep.subr.mxu0 0.0
    %360 = vmatpush1.msra.mxu0 %v309
    %361 = vmatprep.subr.mxu0 0.0
    %362 = vmatpush1.msra.mxu0 %v308
    %363 = vmatprep.subr.mxu0 0.0
    %364 = vmatpush1.msra.mxu0 %v307
    %365 = vmatprep.subr.mxu0 0.0
    %366 = vmatpush1.msra.mxu0 %v306
    %367 = vmatprep.subr.mxu0 0.0
    %368 = vmatpush1.msra.mxu0 %v305
    %369 = vmatprep.subr.mxu0 0.0
    %370 = vmatpush1.msra.mxu0 %v304
    %371 = vmatprep.subr.mxu0 0.0
    %372 = vmatpush2.msra.mxu0 0.0
    %373 = vmatprep.subr.mxu0 0.0
    %374 = vmatpush2.msra.mxu0 0.0
    %375 = vmatprep.subr.mxu0 0.0
    %376 = vmatpush2.msra.mxu0 0.0
    %377 = vmatprep.subr.mxu0 0.0
    %378 = vmatpush2.msra.mxu0 0.0
    %379 = vmatprep.subr.mxu0 0.0
    %380 = vmatpush2.msra.mxu0 0.0
    %381 = vmatprep.subr.mxu0 0.0
    %382 = vmatpush2.msra.mxu0 0.0
    %383 = vmatprep.subr.mxu0 0.0
    %384 = vmatpush2.msra.mxu0 0.0
    %385 = vmatprep.subr.mxu0 0.0
    %386 = vmatpush2.msra.mxu0 0.0
    %387 = vmatprep.subr.mxu0 0.0
    %388 = vmatpush2.msra.mxu0 %v327
    %389 = vmatprep.subr.mxu0 0.0
    %390 = vmatpush2.msra.mxu0 %v326
    %391 = vmatprep.subr.mxu0 0.0
    %392 = vmatpush2.msra.mxu0 %v325
    %393 = vmatprep.subr.mxu0 0.0
    %394 = vmatpush2.msra.mxu0 %v324
    %395 = vmatprep.subr.mxu0 0.0
    %396 = vmatpush2.msra.mxu0 %v323
    %397 = vmatprep.subr.mxu0 0.0
    %398 = vmatpush2.msra.mxu0 %v322
    %399 = vmatprep.subr.mxu0 0.0
    %400 = vmatpush2.msra.mxu0 %v321
    %401 = vmatprep.subr.mxu0 0.0
    %402 = vmatpush2.msra.mxu0 %v320
    %403 = vmatprep.mubr.f32.mxu0 %v337
    %404 = vmatmul.mubr.f32.gmra.mxu0 %v302
    %v405 = vpop.f32.mrf.mxu0
    %v406 = vadd.f32 %v333, %v405
    %v407 = vpop.f32.mrf.mxu0
    %408 = vdwg.mxu0
    %v409 = vsel %vm253, -1e+09, %v406
    %411 = vrot.lane.b32.xlu0 %v406, 122
    %v412 = vpop.permute.xlu0 %411
    %v414 = vsel %vm264, -1e+09, %v412
    %415 = vrot.lane.b32.xlu0 %v406, 116
    %v416 = vpop.permute.xlu0 %415
    %v418 = vsel %vm275, -1e+09, %v416
    %419 = vrot.lane.b32.xlu0 %v406, 110
    %v420 = vpop.permute.xlu0 %419
    %v422 = vsel %vm286, -1e+09, %v420
    %v423 = vmax.f32 %v409, %v414
    %v424 = vmax.f32 %v418, %v422
    %v425 = vmax.f32 %v423, %v424
    %v426 = vsub.f32 %v409, %v425
    %v427 = vmul.f32 %v426, 1.442695
    %v428 = vpow.pop %v427
    %v429 = vsub.f32 %v414, %v425
    %v430 = vmul.f32 %v429, 1.442695
    %v431 = vpow.pop %v430
    %v432 = vsub.f32 %v418, %v425
    %v433 = vmul.f32 %v432, 1.442695
    %v434 = vpow.pop %v433
    %v435 = vsub.f32 %v422, %v425
    %v436 = vmul.f32 %v435, 1.442695
    %v437 = vpow.pop %v436
    %v438 = vadd.f32 %v428, %v431
    %v439 = vadd.f32 %v438, %v434
    %v440 = vadd.f32 %v439, %v437
    %v441 = vrcp.pop %v440
    %v442 = vmul.f32 1.0, %v441
    %v443 = vmul.f32 %v428, %v442
    %v444 = vsel %vm253, 0.0, %v443
    %v445 = vsub.f32 0.0, %v409
    %v446 = vmul.f32 %v445, 1.442695
    %v447 = vpow.pop %v446
    %v448 = vadd.f32 %v447, 1.0
    %v449 = vrcp.pop %v448
    %v450 = vmul.f32 1.0, %v449
    %v451 = vmul.f32 %v444, %v450
    %453 = vrot.lane.b32.xlu0 %v451, 6
    %v454 = vpop.permute.xlu0 %453
    %456 = vrot.lane.b32.xlu0 %v451, 12
    %v457 = vpop.permute.xlu0 %456
    %459 = vrot.lane.b32.xlu0 %v451, 18
    %v460 = vpop.permute.xlu0 %459
    %462 = vrot.lane.b32.xlu0 %v451, 24
    %v463 = vpop.permute.xlu0 %462
    %465 = vrot.lane.b32.xlu0 %v451, 30
    %v466 = vpop.permute.xlu0 %465
    %468 = vrot.lane.b32.xlu0 %v451, 36
    %v469 = vpop.permute.xlu0 %468
    %471 = vrot.lane.b32.xlu0 %v451, 42
    %v472 = vpop.permute.xlu0 %471
    %vm474 = vcmask 48128
    %v475 = vsel %vm474, %v451, %v454
    %vm476 = vcmask 97280
    %v477 = vsel %vm476, %v475, %v457
    %vm478 = vcmask 146432
    %v479 = vsel %vm478, %v477, %v460
    %vm480 = vcmask 195584
    %v481 = vsel %vm480, %v479, %v463
    %vm482 = vcmask 244736
    %v483 = vsel %vm482, %v481, %v466
    %vm484 = vcmask 293888
    %v485 = vsel %vm484, %v483, %v469
    %vm486 = vcmask 343040
    %v487 = vsel %vm486, %v485, %v472
    %v488 = vmul.f32 %v235, %v487
    %v489 = vadd.f32 %v488, 0.0
    %v490 = vmul.f32 %v431, %v442
    %v491 = vsel %vm264, 0.0, %v490
    %v492 = vsub.f32 0.0, %v414
    %v493 = vmul.f32 %v492, 1.442695
    %v494 = vpow.pop %v493
    %v495 = vadd.f32 %v494, 1.0
    %v496 = vrcp.pop %v495
    %v497 = vmul.f32 1.0, %v496
    %v498 = vmul.f32 %v491, %v497
    %500 = vrot.lane.b32.xlu0 %v498, 6
    %v501 = vpop.permute.xlu0 %500
    %503 = vrot.lane.b32.xlu0 %v498, 12
    %v504 = vpop.permute.xlu0 %503
    %506 = vrot.lane.b32.xlu0 %v498, 18
    %v507 = vpop.permute.xlu0 %506
    %509 = vrot.lane.b32.xlu0 %v498, 24
    %v510 = vpop.permute.xlu0 %509
    %512 = vrot.lane.b32.xlu0 %v498, 30
    %v513 = vpop.permute.xlu0 %512
    %515 = vrot.lane.b32.xlu0 %v498, 36
    %v516 = vpop.permute.xlu0 %515
    %518 = vrot.lane.b32.xlu0 %v498, 42
    %v519 = vpop.permute.xlu0 %518
    %v521 = vsel %vm474, %v498, %v501
    %v522 = vsel %vm476, %v521, %v504
    %v523 = vsel %vm478, %v522, %v507
    %v524 = vsel %vm480, %v523, %v510
    %v525 = vsel %vm482, %v524, %v513
    %v526 = vsel %vm484, %v525, %v516
    %v527 = vsel %vm486, %v526, %v519
    %529 = vrot.lane.b32.xlu0 %v527, 48
    %v530 = vpop.permute.xlu0 %529
    %v532 = vmul.f32 %v235, %v530
    %534 = vrot.lane.b32.xlu0 %v532, 80
    %v535 = vpop.permute.xlu0 %534
    %v537 = vadd.f32 %v489, %v535
    %v538 = vmul.f32 %v434, %v442
    %v539 = vsel %vm275, 0.0, %v538
    %v540 = vsub.f32 0.0, %v418
    %v541 = vmul.f32 %v540, 1.442695
    %v542 = vpow.pop %v541
    %v543 = vadd.f32 %v542, 1.0
    %v544 = vrcp.pop %v543
    %v545 = vmul.f32 1.0, %v544
    %v546 = vmul.f32 %v539, %v545
    %548 = vrot.lane.b32.xlu0 %v546, 6
    %v549 = vpop.permute.xlu0 %548
    %551 = vrot.lane.b32.xlu0 %v546, 12
    %v552 = vpop.permute.xlu0 %551
    %554 = vrot.lane.b32.xlu0 %v546, 18
    %v555 = vpop.permute.xlu0 %554
    %557 = vrot.lane.b32.xlu0 %v546, 24
    %v558 = vpop.permute.xlu0 %557
    %560 = vrot.lane.b32.xlu0 %v546, 30
    %v561 = vpop.permute.xlu0 %560
    %563 = vrot.lane.b32.xlu0 %v546, 36
    %v564 = vpop.permute.xlu0 %563
    %566 = vrot.lane.b32.xlu0 %v546, 42
    %v567 = vpop.permute.xlu0 %566
    %v569 = vsel %vm474, %v546, %v549
    %v570 = vsel %vm476, %v569, %v552
    %v571 = vsel %vm478, %v570, %v555
    %v572 = vsel %vm480, %v571, %v558
    %v573 = vsel %vm482, %v572, %v561
    %v574 = vsel %vm484, %v573, %v564
    %v575 = vsel %vm486, %v574, %v567
    %577 = vrot.lane.b32.xlu0 %v575, 96
    %v578 = vpop.permute.xlu0 %577
    %v580 = vmul.f32 %v235, %v578
    %v581 = vmul.f32 %v236, %v578
    %584 = vrot.lane.b32.xlu0 %v580, 32
    %v585 = vpop.permute.xlu0 %584
    %586 = vrot.lane.b32.xlu0 %v581, 32
    %v587 = vpop.permute.xlu0 %586
    %v588 = vsel %vm160, %v585, %v587
    %v590 = vadd.f32 %v537, %v588
    %v591 = vmul.f32 %v437, %v442
    %v592 = vsel %vm286, 0.0, %v591
    %v593 = vsub.f32 0.0, %v422
    %v594 = vmul.f32 %v593, 1.442695
    %v595 = vpow.pop %v594
    %v596 = vadd.f32 %v595, 1.0
    %v597 = vrcp.pop %v596
    %v598 = vmul.f32 1.0, %v597
    %v599 = vmul.f32 %v592, %v598
    %601 = vrot.lane.b32.xlu0 %v599, 6
    %v602 = vpop.permute.xlu0 %601
    %604 = vrot.lane.b32.xlu0 %v599, 12
    %v605 = vpop.permute.xlu0 %604
    %607 = vrot.lane.b32.xlu0 %v599, 18
    %v608 = vpop.permute.xlu0 %607
    %610 = vrot.lane.b32.xlu0 %v599, 24
    %v611 = vpop.permute.xlu0 %610
    %613 = vrot.lane.b32.xlu0 %v599, 30
    %v614 = vpop.permute.xlu0 %613
    %616 = vrot.lane.b32.xlu0 %v599, 36
    %v617 = vpop.permute.xlu0 %616
    %619 = vrot.lane.b32.xlu0 %v599, 42
    %v620 = vpop.permute.xlu0 %619
    %v622 = vsel %vm474, %v599, %v602
    %v623 = vsel %vm476, %v622, %v605
    %v624 = vsel %vm478, %v623, %v608
    %v625 = vsel %vm480, %v624, %v611
    %v626 = vsel %vm482, %v625, %v614
    %v627 = vsel %vm484, %v626, %v617
    %v628 = vsel %vm486, %v627, %v620
    %630 = vrot.lane.b32.xlu0 %v628, 16
    %v631 = vpop.permute.xlu0 %630
    %v633 = vmul.f32 %v236, %v631
    %635 = vrot.lane.b32.xlu0 %v633, 112
    %v636 = vpop.permute.xlu0 %635
    %v638 = vadd.f32 %v590, %v636
    %v639 = vld [vmem:[%s10] sm:$0xff]
    %v640 = vld [vmem:[%s10 + $0x8] sm:$0xff]
    %v641 = vld [vmem:[%s10 + $0x10] sm:$0xff]
    %v642 = vld [vmem:[%s10 + $0x18] sm:$0xff]
    %v643 = vld [vmem:[%s10 + $0x20] sm:$0xff]
    %v644 = vld [vmem:[%s10 + $0x28] sm:$0xff]
    %v645 = vld [vmem:[%s11] sm:$0x1]
    %v647 = vlaneseq
    %v648 = vshrl.u32 %v647, 7
    %v649 = vsub.s32 0, %v648
    %v650 = vrot.slane %v645, %v649
    %v653 = vsel %vm77, %v638, 0
    %655 = vmatprep.subr.mxu0 0.0
    %656 = vmatpush1.msra.mxu0 0.0
    %657 = vmatprep.subr.mxu0 0.0
    %658 = vmatpush1.msra.mxu0 0.0
    %659 = vmatprep.subr.mxu0 0.0
    %660 = vmatpush1.msra.mxu0 0.0
    %661 = vmatprep.subr.mxu0 0.0
    %662 = vmatpush1.msra.mxu0 0.0
    %663 = vmatprep.subr.mxu0 0.0
    %664 = vmatpush1.msra.mxu0 0.0
    %665 = vmatprep.subr.mxu0 0.0
    %666 = vmatpush1.msra.mxu0 0.0
    %667 = vmatprep.subr.mxu0 0.0
    %668 = vmatpush1.msra.mxu0 0.0
    %669 = vmatprep.subr.mxu0 0.0
    %670 = vmatpush1.msra.mxu0 0.0
    %671 = vmatprep.subr.mxu0 0.0
    %672 = vmatpush1.msra.mxu0 0.0
    %673 = vmatprep.subr.mxu0 0.0
    %674 = vmatpush1.msra.mxu0 0.0
    %675 = vmatprep.subr.mxu0 0.0
    %676 = vmatpush1.msra.mxu0 %v644
    %677 = vmatprep.subr.mxu0 0.0
    %678 = vmatpush1.msra.mxu0 %v643
    %679 = vmatprep.subr.mxu0 0.0
    %680 = vmatpush1.msra.mxu0 %v642
    %681 = vmatprep.subr.mxu0 0.0
    %682 = vmatpush1.msra.mxu0 %v641
    %683 = vmatprep.subr.mxu0 0.0
    %684 = vmatpush1.msra.mxu0 %v640
    %685 = vmatprep.subr.mxu0 0.0
    %686 = vmatpush1.msra.mxu0 %v639
    %687 = vmatprep.subr.mxu0 0.0
    %688 = vmatpush2.msra.mxu0 0.0
    %689 = vmatprep.subr.mxu0 0.0
    %690 = vmatpush2.msra.mxu0 0.0
    %691 = vmatprep.subr.mxu0 0.0
    %692 = vmatpush2.msra.mxu0 0.0
    %693 = vmatprep.subr.mxu0 0.0
    %694 = vmatpush2.msra.mxu0 0.0
    %695 = vmatprep.subr.mxu0 0.0
    %696 = vmatpush2.msra.mxu0 0.0
    %697 = vmatprep.subr.mxu0 0.0
    %698 = vmatpush2.msra.mxu0 0.0
    %699 = vmatprep.subr.mxu0 0.0
    %700 = vmatpush2.msra.mxu0 0.0
    %701 = vmatprep.subr.mxu0 0.0
    %702 = vmatpush2.msra.mxu0 0.0
    %703 = vmatprep.subr.mxu0 0.0
    %704 = vmatpush2.msra.mxu0 0.0
    %705 = vmatprep.subr.mxu0 0.0
    %706 = vmatpush2.msra.mxu0 0.0
    %707 = vmatprep.subr.mxu0 0.0
    %708 = vmatpush2.msra.mxu0 0.0
    %709 = vmatprep.subr.mxu0 0.0
    %710 = vmatpush2.msra.mxu0 0.0
    %711 = vmatprep.subr.mxu0 0.0
    %712 = vmatpush2.msra.mxu0 0.0
    %713 = vmatprep.subr.mxu0 0.0
    %714 = vmatpush2.msra.mxu0 0.0
    %715 = vmatprep.subr.mxu0 0.0
    %716 = vmatpush2.msra.mxu0 0.0
    %717 = vmatprep.subr.mxu0 0.0
    %718 = vmatpush2.msra.mxu0 0.0
    %719 = vmatprep.mubr.f32.mxu0 0.0
    %720 = vmatmul.mubr.f32.gmra.mxu0 %v653
    %v721 = vpop.f32.mrf.mxu0
    %v722 = vadd.f32 %v650, %v721
    %v723 = vpop.f32.mrf.mxu0
    %724 = vdwg.mxu0
    %v725 = vsel %vm241, 1, 0
    %vm726 = vcmp.eq.s32.totalorder %v725, 1
    %v727 = vsel %vm726, 0.0, %v722
    %v728 = vadd.f32 %v51, %v727
    %v729 = vsub.f32 0.0, %v728
    %v730 = vmul.f32 %v729, 1.442695
    %v731 = vpow.pop %v730
    %v732 = vadd.f32 %v731, 1.0
    %v733 = vrcp.pop %v732
    %v734 = vmul.f32 1.0, %v733
    %v735 = vmul.f32 %v728, %v734
    %vm736 = vcmask 386048
    %737 = vst.msk [vmem:[#allocation2] sm:$0x3] %vm736, %v735
    %738 = vst.msk [vmem:[#allocation4] sm:$0x3] %vm736, %v728
    // Predicated region
    $region54: #{tpu_custom_call.1} parent=1 // pred_check
      _
    $region55: #{tpu_custom_call.1} parent=1 // pred_check_branch
      %740 = sbr.rel (0) target = $region57
    $region56: #{tpu_custom_call.1} parent=1 // pred_region
      %s742 = ssub.s32 32, 32
      %743 = vsyncadd [#allocation3], %s742
      %s745 = sshll.u32 [#allocation2], 4
      %s746 = int_to_ptr.vmem [resolvable:$true] %s745
      %748 = dma.vmem_to_hbm [thread:$0]  %s746, 32, %s13, [#allocation3]
    $region57: #{tpu_custom_call.1} parent=1 // pred_fallthru
      _
    // Predicated region
    $region58: #{tpu_custom_call.1} parent=1 // pred_check
      _
    $region59: #{tpu_custom_call.1} parent=1 // pred_check_branch
      %750 = sbr.rel (0) target = $region61
    $region60: #{tpu_custom_call.1} parent=1 // pred_region
      %s752 = ssub.s32 32, 32
      %753 = vsyncadd [#allocation5], %s752
      %s755 = sshll.u32 [#allocation4], 4
      %s756 = int_to_ptr.vmem [resolvable:$true] %s755
      %758 = dma.vmem_to_hbm [thread:$0]  %s756, 32, %s14, [#allocation5]
    $region61: #{tpu_custom_call.1} parent=1 // pred_fallthru
      _
    // Predicated region
    $region62: #{tpu_custom_call.1} parent=1 // pred_check
      _
    $region63: #{tpu_custom_call.1} parent=1 // pred_check_branch
      %760 = sbr.rel (0) target = $region65
    $region64: #{tpu_custom_call.1} parent=1 // pred_region
      %761 = dma.done [#allocation3], 32
    $region65: #{tpu_custom_call.1} parent=1 // pred_fallthru
      _
    // Predicated region
    $region66: #{tpu_custom_call.1} parent=1 // pred_check
      _
    $region67: #{tpu_custom_call.1} parent=1 // pred_check_branch
      %763 = sbr.rel (0) target = $region69
    $region68: #{tpu_custom_call.1} parent=1 // pred_region
      %764 = dma.done [#allocation5], 32
    $region69: #{tpu_custom_call.1} parent=1 // pred_fallthru
      _
    %765 = vsyncpa [#allocation3], 1
    %766 = vsyncpa [#allocation5], 1

</llo_original>
